<compile_context>
chip_gen: v7x
topology: tpu7x:2x2x1
jax: 0.10.0
libtpu: 0.0.40
codegen_flags: <defaults>
</compile_context>

<pallas_src>
import functools

import jax
import jax.numpy as jnp
from jax import lax
from jax.experimental import pallas as pl
from jax.experimental.pallas import tpu as pltpu

LANES = 128
_SUB = 8
# Whole-problem-in-VMEM threshold for the fused single-pass kernel (padded
# element count): 2 bf16 inputs (1 MiB) + a handful of f32 temporaries fits
# every TPU generation's VMEM with large headroom.
_FUSED_MAX_ELEMS = 256 * 1024
_VMEM_LIMIT = 48 * 1024 * 1024


def _in_bounds_mask(shape, row_offset, total_elems):
    """In-bounds mask for lane padding / ragged trailing row-block.

    Row-index based (not flat element index) so it cannot overflow int32.
    """
    rows = lax.broadcasted_iota(jnp.int32, shape, 0) + row_offset
    lanes = lax.broadcasted_iota(jnp.int32, shape, 1)
    full_rows = total_elems // LANES
    rem = total_elems % LANES
    return (rows < full_rows) | ((rows == full_rows) & (lanes < rem))


def _finalize_loss(total_f32, n_valid_f32):
    """torch parity: sum and N_valid are rounded through bf16 before dividing."""
    total_b = total_f32.astype(jnp.bfloat16).astype(jnp.float32)
    n_b = n_valid_f32.astype(jnp.bfloat16).astype(jnp.float32)
    # Guard all-invalid input (torch would return inf/nan); norm==0 stays
    # inf/nan exactly like torch.
    return jnp.where(n_valid_f32 > 0, total_b / n_b, jnp.float32(0.0))


# --------------------------------------------------------------------------
# Fused single-pass kernel (whole padded problem resident in VMEM).
# --------------------------------------------------------------------------
def _fused_kernel(o_ref, t_ref, loss_ref, *, total_elems, invalid_value, alpha,
                  needs_mask):
    t_raw = t_ref[...]
    t = t_raw.astype(jnp.float32)            # single up-cast, f32 math everywhere
    o = o_ref[...].astype(jnp.float32)
    valid = t_raw != jnp.asarray(invalid_value, t_raw.dtype)
    d = jnp.abs(o - t)

    if needs_mask:
        in_b = _in_bounds_mask(t.shape, 0, total_elems)
        valid = jnp.logical_and(valid, in_b)
        t = jnp.where(in_b, t, -jnp.inf)
        d = jnp.where(in_b, d, -jnp.inf)

    maxt = jnp.max(t)                        # norm_value = max(target), all pixels
    maxd = jnp.max(d)                        # max |o - t| (unnormalised)
    n_valid = jnp.sum(valid.astype(jnp.float32))

    inv_norm = jnp.float32(1.0) / maxt       # hoisted reciprocal
    c = jnp.float32(alpha) * maxd * inv_norm
    safe_c = jnp.where(c > 0, c, jnp.float32(1.0))
    inv_2c = jnp.where(c > 0, jnp.float32(0.5) / safe_c, jnp.float32(0.0))
    k = -c * c * inv_2c                      # quad = ad*ad*inv_2c + k (one FMA)

    ad = d * inv_norm
    quad = ad * ad * inv_2c + k
    contrib = jnp.where(valid, jnp.where(ad < c, ad, quad), jnp.float32(0.0))
    total = jnp.sum(contrib)

    loss_ref[...] = _finalize_loss(total, n_valid).reshape(1, 1)


# --------------------------------------------------------------------------
# Streaming pass 1: max(target), max(|o - t|), count(target != invalid).
# --------------------------------------------------------------------------
def _pass1_kernel(o_ref, t_ref, maxt_ref, maxd_ref, cnt_ref,
                  acc_maxt, acc_maxd, acc_cnt, *,
                  block_rows, total_elems, invalid_value, needs_mask):
    step = pl.program_id(0)
    last = pl.num_programs(0) - 1

    @pl.when(step == 0)
    def _():
        acc_maxt[...] = jnp.full_like(acc_maxt, -jnp.inf)
        acc_maxd[...] = jnp.full_like(acc_maxd, -jnp.inf)
        acc_cnt[...] = jnp.zeros_like(acc_cnt)

    def body(masked):
        t_raw = t_ref[...]
        t = t_raw.astype(jnp.float32)
        o = o_ref[...].astype(jnp.float32)
        valid = t_raw != jnp.asarray(invalid_value, t_raw.dtype)
        d = jnp.abs(o - t)
        if masked:
            in_b = _in_bounds_mask(t.shape, step * block_rows, total_elems)
            valid = jnp.logical_and(valid, in_b)
            t = jnp.where(in_b, t, -jnp.inf)
            d = jnp.where(in_b, d, -jnp.inf)
        # Fold (block_rows,128) -> (8,128) with major-axis (VPU-only) reduces;
        # the XLU cross-lane reduce happens once, at the last step.
        t3 = t.reshape(-1, _SUB, LANES)
        d3 = d.reshape(-1, _SUB, LANES)
        v3 = valid.astype(jnp.float32).reshape(-1, _SUB, LANES)
        acc_maxt[...] = jnp.maximum(acc_maxt[...], jnp.max(t3, axis=0))
        acc_maxd[...] = jnp.maximum(acc_maxd[...], jnp.max(d3, axis=0))
        acc_cnt[...] = acc_cnt[...] + jnp.sum(v3, axis=0)

    if needs_mask:
        # Mask only on the ragged tail block; full blocks take the fast path.
        @pl.when(step < last)
        def _():
            body(False)

        @pl.when(step == last)
        def _():
            body(True)
    else:
        body(False)

    @pl.when(step == last)
    def _():
        maxt_ref[...] = jnp.max(acc_maxt[...]).reshape(1, 1)
        maxd_ref[...] = jnp.max(acc_maxd[...]).reshape(1, 1)
        cnt_ref[...] = jnp.sum(acc_cnt[...]).reshape(1, 1)


# --------------------------------------------------------------------------
# Streaming pass 2: masked berHu sum + final bf16-rounded division.
# --------------------------------------------------------------------------
def _pass2_kernel(maxt_ref, maxd_ref, cnt_ref, o_ref, t_ref, loss_ref, acc_sum,
                  *, block_rows, total_elems, invalid_value, alpha, needs_mask):
    step = pl.program_id(0)
    last = pl.num_programs(0) - 1

    @pl.when(step == 0)
    def _():
        acc_sum[...] = jnp.zeros_like(acc_sum)

    # Scalar prologue straight from the pass-1 results (SMEM): no XLA glue
    # between the two pallas_calls; a few scalar ops per block is negligible.
    inv_norm = jnp.float32(1.0) / maxt_ref[0, 0]
    c = jnp.float32(alpha) * maxd_ref[0, 0] * inv_norm
    safe_c = jnp.where(c > 0, c, jnp.float32(1.0))
    inv_2c = jnp.where(c > 0, jnp.float32(0.5) / safe_c, jnp.float32(0.0))
    k = -c * c * inv_2c

    def body(masked):
        t_raw = t_ref[...]
        t = t_raw.astype(jnp.float32)
        o = o_ref[...].astype(jnp.float32)
        valid = t_raw != jnp.asarray(invalid_value, t_raw.dtype)
        if masked:
            in_b = _in_bounds_mask(t.shape, step * block_rows, total_elems)
            valid = jnp.logical_and(valid, in_b)
        ad = jnp.abs(o - t) * inv_norm       # one multiply instead of a divide
        quad = ad * ad * inv_2c + k
        contrib = jnp.where(valid, jnp.where(ad < c, ad, quad), jnp.float32(0.0))
        acc_sum[...] = acc_sum[...] + jnp.sum(
            contrib.reshape(-1, _SUB, LANES), axis=0)

    if needs_mask:
        @pl.when(step < last)
        def _():
            body(False)

        @pl.when(step == last)
        def _():
            body(True)
    else:
        body(False)

    @pl.when(step == last)
    def _():
        total = jnp.sum(acc_sum[...])
        loss_ref[...] = _finalize_loss(total, cnt_ref[0, 0]).reshape(1, 1)


# --------------------------------------------------------------------------
# Wrapper.
# --------------------------------------------------------------------------
def berhu_loss_bf16(output, target, alpha=0.2, invalid_value=-1.0,
                    block_rows=8192, fused_max_elems=_FUSED_MAX_ELEMS):
    """berHu loss over bf16 tensors (NCHW or any shape). Returns bf16 scalar."""
    assert output.shape == target.shape, \
        "[ProxySuperVisionLoss] Differently sized output and target!"

    n = int(output.size)
    flat_o = output.reshape(-1)              # free reshape (no copy)
    flat_t = target.reshape(-1)

    r = -(-n // LANES)                       # rows of the lane-dense (R,128) slab
    padded = r * LANES
    if padded != n:
        # Pad values are irrelevant: excluded in-kernel by the index mask.
        flat_o = jnp.pad(flat_o, (0, padded - n))
        flat_t = jnp.pad(flat_t, (0, padded - n))
    o2 = flat_o.reshape(r, LANES)
    t2 = flat_t.reshape(r, LANES)
    lane_ragged = padded != n

    # ---- fused single-pass path (small / VMEM-resident tensors) ----
    if padded <= max(int(fused_max_elems), _SUB * LANES):
        fused = pl.pallas_call(
            functools.partial(_fused_kernel, total_elems=n,
                              invalid_value=invalid_value, alpha=alpha,
                              needs_mask=lane_ragged),
            out_shape=jax.ShapeDtypeStruct((1, 1), jnp.float32),
            compiler_params=pltpu.CompilerParams(vmem_limit_bytes=_VMEM_LIMIT),
        )
        return fused(o2, t2)[0, 0].astype(jnp.bfloat16)

    # ---- streaming two-pass path ----
    block_rows = max(_SUB, (int(block_rows) // _SUB) * _SUB)   # multiple of 8
    br = max(_SUB, min(block_rows, (r // _SUB) * _SUB))        # <= r, mult of 8
    num_blocks = -(-r // br)
    needs_mask = lane_ragged or (r % br != 0)

    data_spec = pl.BlockSpec((br, LANES), lambda i: (i, 0))
    scalar_spec = pl.BlockSpec((1, 1), lambda i: (0, 0))
    scalar_shape = jax.ShapeDtypeStruct((1, 1), jnp.float32)
    smem_spec = pl.BlockSpec(memory_space=pltpu.MemorySpace.SMEM)
    compiler_params = pltpu.CompilerParams(
        dimension_semantics=("arbitrary",),          # reduction axis
        vmem_limit_bytes=_VMEM_LIMIT,
    )

    # Pass 1: global max(target), max(|o-t|), valid count.
    maxt, maxd, cnt = pl.pallas_call(
        functools.partial(_pass1_kernel, block_rows=br, total_elems=n,
                          invalid_value=invalid_value, needs_mask=needs_mask),
        out_shape=(scalar_shape, scalar_shape, scalar_shape),
        grid=(num_blocks,),
        in_specs=[data_spec, data_spec],
        out_specs=(scalar_spec, scalar_spec, scalar_spec),
        scratch_shapes=[pltpu.VMEM((_SUB, LANES), jnp.float32)] * 3,
        compiler_params=compiler_params,
    )(o2, t2)

    # Pass 2: masked berHu sum + bf16-rounded division, scalars via SMEM.
    loss = pl.pallas_call(
        functools.partial(_pass2_kernel, block_rows=br, total_elems=n,
                          invalid_value=invalid_value, alpha=alpha,
                          needs_mask=needs_mask),
        out_shape=jax.ShapeDtypeStruct((1, 1), jnp.float32),
        grid=(num_blocks,),
        in_specs=[smem_spec, smem_spec, smem_spec, data_spec, data_spec],
        out_specs=scalar_spec,
        scratch_shapes=[pltpu.VMEM((_SUB, LANES), jnp.float32)],
        compiler_params=compiler_params,
    )(maxt, maxd, cnt, o2, t2)

    return loss[0, 0].astype(jnp.bfloat16)


if __name__ == "__main__":
    key = jax.random.PRNGKey(0)
    k_t, k_m, k_n = jax.random.split(key, 3)

    loss_fn = jax.jit(functools.partial(berhu_loss_bf16,
                                        alpha=0.2, invalid_value=-1.0))

    # Main demo shape: NCHW, numel = 2048 (multiple of 128) -> fused VMEM path.
    shape = (2, 4, 16, 16)
    target_f32 = jax.random.uniform(k_t, shape, jnp.float32, 0.1, 5.0)
    invalid = jax.random.bernoulli(k_m, 0.1, shape)
    target = jnp.where(invalid, -1.0, target_f32).astype(jnp.bfloat16)
    noise = 0.1 * jax.random.normal(k_n, shape, jnp.float32)
    output = (target_f32 + noise).astype(jnp.bfloat16)
    loss = loss_fn(output, target)
    jax.block_until_ready(loss)

    # Ragged shape (numel % 128 != 0) -> fused path with lane mask.
    shape2 = (2, 3, 15, 17)
    t2f = jax.random.uniform(k_t, shape2, jnp.float32, 0.1, 5.0)
    inv2 = jax.random.bernoulli(k_m, 0.1, shape2)
    tgt2 = jnp.where(inv2, -1.0, t2f).astype(jnp.bfloat16)
    out2 = (t2f + 0.1 * jax.random.normal(k_n, shape2, jnp.float32)
            ).astype(jnp.bfloat16)
    loss2 = loss_fn(out2, tgt2)
    jax.block_until_ready(loss2)

    # Same ragged data through the streaming two-pass path (tiny row blocks)
    # to exercise the multi-block masked-tail + SMEM scalar plumbing.
    stream_fn = jax.jit(functools.partial(
        berhu_loss_bf16, alpha=0.2, invalid_value=-1.0,
        fused_max_elems=0, block_rows=8))
    loss3 = stream_fn(out2, tgt2)
    jax.block_until_ready(loss3)

    print("KERNEL_OK")
</pallas_src>

<mosaic_0001>
module attributes {stable_mosaic.version = 11 : i64} {
  func.func @_fused_kernel(%arg0: memref<16x128xbf16, #tpu.memory_space<vmem>>, %arg1: memref<16x128xbf16, #tpu.memory_space<vmem>>, %arg2: memref<1x1xf32, #tpu.memory_space<vmem>>) attributes {dimension_semantics = [], scalar_prefetch = 0 : i64, scratch_operands = 0 : i64, tpu.core_type = #tpu.core_type<tc>} {
    %c0 = arith.constant 0 : index
    %c0_0 = arith.constant 0 : index
    %0 = vector.load %arg1[%c0, %c0_0] : memref<16x128xbf16, #tpu.memory_space<vmem>>, vector<16x128xbf16>
    %1 = arith.extf %0 : vector<16x128xbf16> to vector<16x128xf32>
    %c0_1 = arith.constant 0 : index
    %c0_2 = arith.constant 0 : index
    %2 = vector.load %arg0[%c0_1, %c0_2] : memref<16x128xbf16, #tpu.memory_space<vmem>>, vector<16x128xbf16>
    %3 = arith.extf %2 : vector<16x128xbf16> to vector<16x128xf32>
    %cst = arith.constant -1.000000e+00 : bf16
    %4 = vector.broadcast %cst : bf16 to vector<16x128xbf16>
    %5 = arith.cmpf one, %0, %4 : vector<16x128xbf16>
    %6 = arith.subf %3, %1 : vector<16x128xf32>
    %7 = math.absf %6 : vector<16x128xf32>
    %8 = vector.shape_cast %1 : vector<16x128xf32> to vector<1x16x128xf32>
    %cst_3 = arith.constant dense<0xFF800000> : vector<1xf32>
    %9 = vector.multi_reduction <maximumf>, %8, %cst_3 [1, 2] : vector<1x16x128xf32> to vector<1xf32>
    %10 = vector.shape_cast %9 : vector<1xf32> to vector<1x1x1xf32>
    %11 = vector.extract %10[0, 0, 0] : f32 from vector<1x1x1xf32>
    %12 = vector.shape_cast %7 : vector<16x128xf32> to vector<1x16x128xf32>
    %cst_4 = arith.constant dense<0xFF800000> : vector<1xf32>
    %13 = vector.multi_reduction <maximumf>, %12, %cst_4 [1, 2] : vector<1x16x128xf32> to vector<1xf32>
    %14 = vector.shape_cast %13 : vector<1xf32> to vector<1x1x1xf32>
    %15 = vector.extract %14[0, 0, 0] : f32 from vector<1x1x1xf32>
    %16 = arith.extui %5 : vector<16x128xi1> to vector<16x128xi32>
    %17 = arith.sitofp %16 : vector<16x128xi32> to vector<16x128xf32>
    %18 = vector.shape_cast %17 : vector<16x128xf32> to vector<1x16x128xf32>
    %cst_5 = arith.constant dense<0.000000e+00> : vector<1xf32>
    %19 = vector.multi_reduction <add>, %18, %cst_5 [1, 2] : vector<1x16x128xf32> to vector<1xf32>
    %20 = vector.shape_cast %19 : vector<1xf32> to vector<1x1x1xf32>
    %21 = vector.extract %20[0, 0, 0] : f32 from vector<1x1x1xf32>
    %cst_6 = arith.constant 1.000000e+00 : f32
    %22 = arith.divf %cst_6, %11 : f32
    %cst_7 = arith.constant 2.000000e-01 : f32
    %23 = arith.mulf %cst_7, %15 : f32
    %24 = arith.mulf %23, %22 : f32
    %cst_8 = arith.constant 0.000000e+00 : f32
    %25 = arith.cmpf ogt, %24, %cst_8 : f32
    %cst_9 = arith.constant 1.000000e+00 : f32
    %26 = arith.select %25, %24, %cst_9 : f32
    %cst_10 = arith.constant 0.000000e+00 : f32
    %27 = arith.cmpf ogt, %24, %cst_10 : f32
    %cst_11 = arith.constant 5.000000e-01 : f32
    %28 = arith.divf %cst_11, %26 : f32
    %cst_12 = arith.constant 0.000000e+00 : f32
    %29 = arith.select %27, %28, %cst_12 : f32
    %cst_13 = arith.constant 0.000000e+00 : f32
    %30 = arith.subf %cst_13, %24 : f32
    %31 = arith.mulf %30, %24 : f32
    %32 = arith.mulf %31, %29 : f32
    %33 = vector.broadcast %22 : f32 to vector<16x128xf32>
    %34 = arith.mulf %7, %33 : vector<16x128xf32>
    %35 = arith.mulf %34, %34 : vector<16x128xf32>
    %36 = vector.broadcast %29 : f32 to vector<16x128xf32>
    %37 = arith.mulf %35, %36 : vector<16x128xf32>
    %38 = vector.broadcast %32 : f32 to vector<16x128xf32>
    %39 = arith.addf %37, %38 : vector<16x128xf32>
    %40 = vector.broadcast %24 : f32 to vector<16x128xf32>
    %41 = arith.cmpf olt, %34, %40 : vector<16x128xf32>
    %42 = arith.select %41, %34, %39 : vector<16x128xi1>, vector<16x128xf32>
    %cst_14 = arith.constant 0.000000e+00 : f32
    %43 = vector.broadcast %cst_14 : f32 to vector<16x128xf32>
    %44 = arith.select %5, %42, %43 : vector<16x128xi1>, vector<16x128xf32>
    %45 = vector.shape_cast %44 : vector<16x128xf32> to vector<1x16x128xf32>
    %cst_15 = arith.constant dense<0.000000e+00> : vector<1xf32>
    %46 = vector.multi_reduction <add>, %45, %cst_15 [1, 2] : vector<1x16x128xf32> to vector<1xf32>
    %47 = vector.shape_cast %46 : vector<1xf32> to vector<1x1x1xf32>
    %48 = vector.extract %47[0, 0, 0] : f32 from vector<1x1x1xf32>
    %49 = arith.truncf %48 : f32 to bf16
    %50 = arith.extf %49 : bf16 to f32
    %51 = arith.truncf %21 : f32 to bf16
    %52 = arith.extf %51 : bf16 to f32
    %cst_16 = arith.constant 0.000000e+00 : f32
    %53 = arith.cmpf ogt, %21, %cst_16 : f32
    %54 = arith.divf %50, %52 : f32
    %cst_17 = arith.constant 0.000000e+00 : f32
    %55 = arith.select %53, %54, %cst_17 : f32
    %56 = vector.broadcast %55 : f32 to vector<1x1xf32>
    %c0_18 = arith.constant 0 : index
    %c0_19 = arith.constant 0 : index
    %57 = vector.load %arg2[%c0_18, %c0_19] : memref<1x1xf32, #tpu.memory_space<vmem>>, vector<1x1xf32>
    tpu.vector_store %arg2[%c0_18, %c0_19], %56 {strides = array<i32>} : memref<1x1xf32, #tpu.memory_space<vmem>>, vector<1x1xf32>,
    return
  }
}

</mosaic_0001>

<llo_original>
// kernel: berhu_loss_bf16.1
$region0: #{berhu_loss_bf16.1}
  #allocation0 [shape = 'u32[]', space=smem, size = 0x4, offset = 0x4, fixed_abs, tag = 'smem constant byte address 0x4 - core index']
  #allocation1 [shape = 'u32[144,128]{1,0:T(1,128)}', space=vmem, size = 0x12000, scoped, tag = 'internal scratch']
  %s0 = inlined_call_operand.vmem [shape: bf16[16,128], index: 0, kind: input, shape index: {}]
  %s1 = inlined_call_operand.vmem [shape: bf16[16,128], index: 1, kind: input, shape index: {}]
  %s2 = inlined_call_operand.hbm [shape: f32[1,1], index: 2, kind: output, shape index: {}]
  %s3 = sld [smem:[#allocation0]]
  $region18: #{berhu_loss_bf16.1} parent=0
    _
  %s5 = ssub.s32 1, %s3
  %s6 = scalar_select 0, %s5, %s3
  $region1: #{berhu_loss_bf16.1} parent=0
    #allocation2 [shape = 'u8[512]{0}', space=vmem, size = 0x400, scoped, tag = 'output window, operand 0, single buffered']
    #allocation3 [shape = 's32[1]{0}', space=sflag, size = 0x4, scoped, tag = 'scoped memory for berhu_loss_bf16.1']
    %7 = vsyncpa [#allocation3], 0
    // Predicated region
    $region2: #{berhu_loss_bf16.1} parent=1 // pred_check
      _
    $region3: #{berhu_loss_bf16.1} parent=1 // pred_check_branch
      %9 = sbr.rel (0) target = $region5
    $region4: #{berhu_loss_bf16.1} parent=1 // pred_region
      _
    $region5: #{berhu_loss_bf16.1} parent=1 // pred_fallthru
      _
    // Predicated region
    $region6: #{berhu_loss_bf16.1} parent=1 // pred_check
      _
    $region7: #{berhu_loss_bf16.1} parent=1 // pred_check_branch
      %11 = sbr.rel (0) target = $region9
    $region8: #{berhu_loss_bf16.1} parent=1 // pred_region
      _
    $region9: #{berhu_loss_bf16.1} parent=1 // pred_fallthru
      _
    %v15 = vld [vmem:[%s1] sm:$0xf]
    %v16 = vld [vmem:[%s1 + $0x4] sm:$0xf]
    %v17 = vunpack.c.l.bf16 %v15
    %v18 = vunpack.c.l.bf16 %v16
    %v19 = vld [vmem:[%s0] sm:$0xf]
    %v20 = vld [vmem:[%s0 + $0x4] sm:$0xf]
    %v21 = vunpack.c.l.bf16 %v19
    %v22 = vunpack.c.l.bf16 %v20
    %vm23 = vcmp.ne.bf16.partialorder %v15, 3212885888
    %vm24 = vcmp.ne.bf16.partialorder %v16, 3212885888
    %v25 = vsub.f32 %v21, %v17
    %v26 = vsub.f32 %v22, %v18
    %v27 = vand.u32 2147483647, %v25
    %v28 = vand.u32 2147483647, %v26
    %v29 = vmax.f32 %v17, %v18
    %30 = vmax.xlane.f32.xlu0 %v29
    %v31 = vpop.xlane.xlu0 %30
    %v32 = vrot.slane %v31, 4
    %v33 = vmax.f32 %v31, %v32
    %v34 = vrot.slane %v33, 2
    %v35 = vmax.f32 %v33, %v34
    %v36 = vrot.slane %v35, 1
    %v37 = vmax.f32 %v35, %v36
    %s38 = vtos %v37
    %v39 = vmax.f32 %v27, %v28
    %40 = vmax.xlane.f32.xlu0 %v39
    %v41 = vpop.xlane.xlu0 %40
    %v42 = vrot.slane %v41, 4
    %v43 = vmax.f32 %v41, %v42
    %v44 = vrot.slane %v43, 2
    %v45 = vmax.f32 %v43, %v44
    %v46 = vrot.slane %v45, 1
    %v47 = vmax.f32 %v45, %v46
    %s48 = vtos %v47
    %v49 = vsel %vm23, 65537, 0
    %v50 = vsel %vm24, 65537, 0
    %v51 = vunpack.c.l.b16 %v49
    %v52 = vunpack.c.l.b16 %v50
    %vm53 = vcmp.ne.s32.totalorder %v51, 0
    %vm54 = vcmp.ne.s32.totalorder %v52, 0
    %v55 = vsel %vm53, 1, 0
    %v56 = vsel %vm54, 1, 0
    %v57 = vcvt.s32.f32 %v55
    %v58 = vcvt.s32.f32 %v56
    %v59 = vadd.f32 %v57, %v58
    %60 = vadd.xlane.f32.xlu0 %v59
    %v61 = vpop.xlane.xlu0 %60
    %v62 = vrot.slane %v61, 4
    %v63 = vadd.f32 %v61, %v62
    %v64 = vrot.slane %v63, 2
    %v65 = vadd.f32 %v63, %v64
    %v66 = vrot.slane %v65, 1
    %v67 = vadd.f32 %v65, %v66
    %s68 = vtos %v67
    %v69 = vstv %s38
    %v70 = vrcp.pop %v69
    %s71 = vtos %v70
    %s72 = smul.f32 %s48, 0.2
    %s73 = smul.f32 %s72, %s71
    %p74 = scmp.gt.f32.partialorder %s73, 0.0
    %s75 = scalar_select %p74, %s73, 1.0
    %v76 = vstv %s75
    %v77 = vrcp.pop %v76
    %s78 = vtos %v77
    %s79 = smul.f32 0.5, %s78
    %s80 = scalar_select %p74, %s79, 0.0
    %s81 = ssub.f32 0.0, %s73
    %s82 = smul.f32 %s81, %s73
    %s83 = smul.f32 %s82, %s80
    %v84 = vstv %s71
    %v85 = vmul.f32 %v27, %v84
    %v86 = vmul.f32 %v28, %v84
    %v87 = vmul.f32 %v85, %v85
    %v88 = vmul.f32 %v86, %v86
    %v89 = vstv %s80
    %v90 = vmul.f32 %v87, %v89
    %v91 = vmul.f32 %v88, %v89
    %v92 = vstv %s83
    %v93 = vadd.f32 %v90, %v92
    %v94 = vadd.f32 %v91, %v92
    %v95 = vstv %s73
    %vm96 = vcmp.lt.f32.partialorder %v85, %v95
    %vm97 = vcmp.lt.f32.partialorder %v86, %v95
    %v98 = vsel %vm96, %v85, %v93
    %v99 = vsel %vm97, %v86, %v94
    %v100 = vsel %vm53, %v98, 0.0
    %v101 = vsel %vm54, %v99, 0.0
    %v102 = vadd.f32 %v100, %v101
    %103 = vadd.xlane.f32.xlu0 %v102
    %v104 = vpop.xlane.xlu0 %103
    %v105 = vrot.slane %v104, 4
    %v106 = vadd.f32 %v104, %v105
    %v107 = vrot.slane %v106, 2
    %v108 = vadd.f32 %v106, %v107
    %v109 = vrot.slane %v108, 1
    %v110 = vadd.f32 %v108, %v109
    %s111 = vtos %v110
    %p113 = scmp.ne.f32.partialorder %s111, %s111
    %s114 = sshrl.u32 %s111, 16
    %s115 = sand.u32 %s114, 1
    %s116 = sadd.s32 32767, %s115
    %s117 = sadd.s32 %s111, %s116
    %s118 = sand.u32 %s117, 4294901760
    %s119 = scalar_select %p113, 2143289344, %s118
    %s121 = sshrl.u32 %s119, 16
    %s122 = sand.u32 %s121, 32767
    %s123 = sand.u32 %s121, 32768
    %s124 = sshll.u32 %s122, 16
    %p125 = scmp.ge.s32.totalorder %s124, 2139095040
    %p126 = scmp.lt.s32.totalorder %s124, 8388608
    %s127 = sadd.s32 %s124, 8388608
    %s130 = ssub.f32 %s127, 8388608
    %s132 = scalar_select %p126, %s130, %s124
    %s133 = scalar_select %p125, %s124, %s132
    %s134 = sshll.u32 %s123, 16
    %s135 = sor.u32 %s133, %s134
    %p138 = scmp.ne.f32.partialorder %s68, %s68
    %s139 = sshrl.u32 %s68, 16
    %s140 = sand.u32 %s139, 1
    %s141 = sadd.s32 32767, %s140
    %s142 = sadd.s32 %s68, %s141
    %s143 = sand.u32 %s142, 4294901760
    %s144 = scalar_select %p138, 2143289344, %s143
    %s146 = sshrl.u32 %s144, 16
    %s147 = sand.u32 %s146, 32767
    %s148 = sand.u32 %s146, 32768
    %s149 = sshll.u32 %s147, 16
    %p150 = scmp.ge.s32.totalorder %s149, 2139095040
    %p151 = scmp.lt.s32.totalorder %s149, 8388608
    %s152 = sadd.s32 %s149, 8388608
    %s155 = ssub.f32 %s152, 8388608
    %s157 = scalar_select %p151, %s155, %s149
    %s158 = scalar_select %p150, %s149, %s157
    %s159 = sshll.u32 %s148, 16
    %s160 = sor.u32 %s158, %s159
    %p162 = scmp.gt.f32.partialorder %s68, 0.0
    %v163 = vstv %s160
    %v164 = vrcp.pop %v163
    %s165 = vtos %v164
    %s166 = smul.f32 %s135, %s165
    %s167 = scalar_select %p162, %s166, 0.0
    %v168 = vstv %s167
    %vm169 = vcmask 0
    %170 = vst.msk [vmem:[#allocation2] sm:$0x1] %vm169, %v168
    // Predicated region
    $region10: #{berhu_loss_bf16.1} parent=1 // pred_check
      _
    $region11: #{berhu_loss_bf16.1} parent=1 // pred_check_branch
      %172 = sbr.rel (0) target = $region13
    $region12: #{berhu_loss_bf16.1} parent=1 // pred_region
      %s174 = ssub.s32 16, 16
      %175 = vsyncadd [#allocation3], %s174
      %s177 = sshll.u32 [#allocation2], 4
      %s178 = int_to_ptr.vmem [resolvable:$true] %s177
      %180 = dma.vmem_to_hbm [thread:$0]  %s178, 16, %s2, [#allocation3]
    $region13: #{berhu_loss_bf16.1} parent=1 // pred_fallthru
      _
    // Predicated region
    $region14: #{berhu_loss_bf16.1} parent=1 // pred_check
      _
    $region15: #{berhu_loss_bf16.1} parent=1 // pred_check_branch
      %182 = sbr.rel (0) target = $region17
    $region16: #{berhu_loss_bf16.1} parent=1 // pred_region
      %183 = dma.done [#allocation3], 16
    $region17: #{berhu_loss_bf16.1} parent=1 // pred_fallthru
      _
    %184 = vsyncpa [#allocation3], 1

</llo_original>
